<compile_context>
chip_gen: v6e
topology: v6e:2x2x1
jax: 0.10.0
libtpu: 0.0.40
codegen_flags: <defaults>
</compile_context>

<pallas_src>
import functools

import jax
import jax.numpy as jnp
from jax.experimental import pallas as pl
from jax.experimental.pallas import tpu as pltpu


_VMEM_LIMIT = 48 * 1024 * 1024    # explicit scoped-VMEM limit; fits v7x's 64 MiB TC
_TILE_BUDGET = 40 * 1024 * 1024   # working-set budget used for tile selection
_SMALL_FUSED_MAX_NODES = 2048     # padded-N cutoff for the fully fused 2-layer path


# --------------------------------------------------------------------------
# Kernels
# --------------------------------------------------------------------------

def gcn_layer_kernel(adj_ref, x_ref, wt_ref, b_ref, o_ref, acc_ref, *,
                     apply_relu, x_resident, tk):
    """One GCN layer, fused:  out[i] = (sum_k A[i,k] @ X[k]) @ W^T + b  (+relu).

    Grid = (row tiles ["parallel"], adjacency reduction ["arbitrary"]).
    acc_ref is an f32 VMEM scratch of shape (tm, cin).
    """
    k = pl.program_id(1)

    @pl.when(k == 0)
    def _init():
        acc_ref[...] = jnp.zeros_like(acc_ref)

    if x_resident:
        # X is fully resident in VMEM; slice the current k-chunk in place.
        start = pl.multiple_of(k * tk, tk)
        xk = x_ref[pl.ds(start, tk), :]
    else:
        xk = x_ref[...]

    acc_ref[...] += jnp.dot(adj_ref[...], xk, preferred_element_type=jnp.float32)

    @pl.when(k == pl.num_programs(1) - 1)
    def _finalize():
        # Fused dense linear: (A_hat @ X) @ W^T + b.  W is resident (32 KiB-ish).
        r = jnp.dot(acc_ref[...].astype(wt_ref.dtype), wt_ref[...],
                    preferred_element_type=jnp.float32) + b_ref[...]
        if apply_relu:
            r = jnp.maximum(r, 0.0)
        # NOTE: padded node rows produce relu(b) here (adjacency rows are zero);
        # this never contaminates valid outputs because padded adjacency
        # *columns* are zero in the next layer, and padded rows are sliced off.
        o_ref[...] = r.astype(o_ref.dtype)


def fused_two_layer_kernel(adj_ref, x_ref, w0t_ref, b0_ref, w1t_ref, b1_ref,
                           o_ref, h_ref):
    """Small-graph path: both layers in one kernel, everything VMEM-resident."""
    adj = adj_ref[...]
    ax = jnp.dot(adj, x_ref[...], preferred_element_type=jnp.float32)
    h = jnp.dot(ax.astype(w0t_ref.dtype), w0t_ref[...],
                preferred_element_type=jnp.float32) + b0_ref[...]
    h_ref[...] = jnp.maximum(h, 0.0).astype(h_ref.dtype)
    ah = jnp.dot(adj, h_ref[...], preferred_element_type=jnp.float32)
    y = jnp.dot(ah.astype(w1t_ref.dtype), w1t_ref[...],
                preferred_element_type=jnp.float32) + b1_ref[...]
    o_ref[...] = y.astype(o_ref.dtype)


# --------------------------------------------------------------------------
# Pallas wrappers
# --------------------------------------------------------------------------

def _round_up(x, m):
    return (x + m - 1) // m * m


def _pick_layer_tiles(n_pad, cin, cout, out_itemsize):
    """Pick (tm, tk, x_resident) against the VMEM working-set budget."""
    tm_cands = [t for t in (2048, 1024, 512, 256, 128) if n_pad % t == 0]
    tk_cands = [t for t in (4096, 2048, 1024, 512, 256, 128) if n_pad % t == 0]
    # Prefer >=2 row tiles so the "parallel" axis feeds both v7x TensorCores.
    multi = [t for t in tm_cands if n_pad // t >= 2]
    if multi:
        tm_cands = multi
    w_bytes = 2 * cin * cout * 2  # resident W^T (bf16, worst-case 2 buffers)
    for x_res in (True, False):
        for tm in tm_cands:
            for tk in tk_cands:
                adj_b = 2 * tm * tk * 2                 # double-buffered bf16 adj tile
                acc_b = tm * cin * 4                    # f32 accumulator
                out_b = 2 * tm * cout * out_itemsize    # output tile
                x_b = (2 * n_pad * cin * 2) if x_res else (2 * tk * cin * 2)
                if adj_b + acc_b + out_b + x_b + w_bytes <= _TILE_BUDGET:
                    return tm, tk, x_res
    return 128, 128, False


def _gcn_layer(adj, x, wt, bias, *, apply_relu, out_dtype):
    """Tiled fused GCN layer: (A_hat @ X) @ W^T + b (+relu)."""
    n = adj.shape[0]
    cin = x.shape[1]
    cout = wt.shape[1]
    out_itemsize = jnp.dtype(out_dtype).itemsize
    tm, tk, x_res = _pick_layer_tiles(n, cin, cout, out_itemsize)
    grid_i, grid_k = n // tm, n // tk

    kernel = functools.partial(gcn_layer_kernel, apply_relu=apply_relu,
                               x_resident=x_res, tk=tk)
    x_spec = (pl.BlockSpec((n, cin), lambda i, k: (0, 0)) if x_res
              else pl.BlockSpec((tk, cin), lambda i, k: (k, 0)))
    z_bytes = x.size * x.dtype.itemsize * (1 if x_res else grid_i)

    return pl.pallas_call(
        kernel,
        out_shape=jax.ShapeDtypeStruct((n, cout), out_dtype),
        grid_spec=pltpu.PrefetchScalarGridSpec(
            num_scalar_prefetch=0,
            grid=(grid_i, grid_k),
            in_specs=[
                pl.BlockSpec((tm, tk), lambda i, k: (i, k)),
                x_spec,
                pl.BlockSpec((cin, cout), lambda i, k: (0, 0)),
                pl.BlockSpec((1, cout), lambda i, k: (0, 0)),
            ],
            out_specs=pl.BlockSpec((tm, cout), lambda i, k: (i, 0)),
            scratch_shapes=[pltpu.VMEM((tm, cin), jnp.float32)],
        ),
        compiler_params=pltpu.CompilerParams(
            dimension_semantics=("parallel", "arbitrary"),
            vmem_limit_bytes=_VMEM_LIMIT,
        ),
        cost_estimate=pl.CostEstimate(
            flops=2 * n * n * cin + 2 * n * cin * cout,
            transcendentals=0,
            bytes_accessed=(adj.size * adj.dtype.itemsize
                            + z_bytes
                            + wt.size * wt.dtype.itemsize
                            + n * cout * out_itemsize),
        ),
    )(adj, x, wt, bias)


def _fused_two_layer(adj, x, w0t, b0, w1t, b1, *, out_dtype):
    """Small-graph path: adjacency + weights resident, both layers in one call."""
    n, cin = x.shape
    hid = w0t.shape[1]
    cout = w1t.shape[1]
    return pl.pallas_call(
        fused_two_layer_kernel,
        out_shape=jax.ShapeDtypeStruct((n, cout), out_dtype),
        grid_spec=pltpu.PrefetchScalarGridSpec(
            num_scalar_prefetch=0,
            grid=(1,),
            in_specs=[
                pl.BlockSpec((n, n), lambda i: (0, 0)),
                pl.BlockSpec((n, cin), lambda i: (0, 0)),
                pl.BlockSpec((cin, hid), lambda i: (0, 0)),
                pl.BlockSpec((1, hid), lambda i: (0, 0)),
                pl.BlockSpec((hid, cout), lambda i: (0, 0)),
                pl.BlockSpec((1, cout), lambda i: (0, 0)),
            ],
            out_specs=pl.BlockSpec((n, cout), lambda i: (0, 0)),
            scratch_shapes=[pltpu.VMEM((n, hid), jnp.bfloat16)],
        ),
        compiler_params=pltpu.CompilerParams(
            dimension_semantics=("arbitrary",),
            vmem_limit_bytes=_VMEM_LIMIT,
        ),
        cost_estimate=pl.CostEstimate(
            flops=(2 * n * n * cin + 2 * n * cin * hid
                   + 2 * n * n * hid + 2 * n * hid * cout),
            transcendentals=0,
            bytes_accessed=(adj.size * adj.dtype.itemsize
                            + x.size * x.dtype.itemsize
                            + w0t.size * w0t.dtype.itemsize
                            + w1t.size * w1t.dtype.itemsize
                            + n * cout * jnp.dtype(out_dtype).itemsize),
        ),
    )(adj, x, w0t, b0, w1t, b1)


# --------------------------------------------------------------------------
# Glue (plain JAX): adjacency construction, padding, parameter plumbing
# --------------------------------------------------------------------------

def build_adjacency_padded(edge_index, num_nodes, n_pad, use_mp,
                           dtype=jnp.bfloat16):
    """Dense D^-1/2 (A + I) D^-1/2 built directly at the padded size.

    Duplicate edges are summed (matches scatter-add message passing).  Padded
    rows/cols have degree 0 -> scaled to exactly zero.  One f32 build, one
    fused d^-1/2 row/col scaling, one cast -- no extra N^2 passes.
    """
    if not use_mp:
        ii = jnp.arange(num_nodes)
        return jnp.zeros((n_pad, n_pad), dtype).at[ii, ii].set(
            jnp.asarray(1.0, dtype))
    row, col = edge_index[0], edge_index[1]
    a = jnp.zeros((n_pad, n_pad), jnp.float32)
    a = a.at[row, col].add(1.0)
    ii = jnp.arange(num_nodes)
    a = a.at[ii, ii].add(1.0)                       # self loops (valid nodes only)
    deg = a.sum(axis=1)
    d_inv_sqrt = jnp.where(deg > 0, jax.lax.rsqrt(deg), 0.0)
    return (d_inv_sqrt[:, None] * a * d_inv_sqrt[None, :]).astype(dtype)


def xavier_uniform(key, shape, gain=1.414):
    """nn.init.xavier_uniform_ for an nn.Linear weight of shape (fan_out, fan_in)."""
    fan_out, fan_in = shape
    limit = gain * (6.0 / (fan_in + fan_out)) ** 0.5
    return jax.random.uniform(key, shape, jnp.float32, -limit, limit)


def my_noisy_gcn_forward(x, edge_index, params, use_mp=True,
                         allow_fused_small=True):
    n, in_ch = x.shape
    w0, b0, w1, b1 = params
    hid_ch, out_ch = w0.shape[0], w1.shape[0]

    # Padded sizes: 128-lane feature dims, 128-row node dim -> lane-dense stores
    # and full MXU width.  Zero padding keeps padded lanes/rows inert.
    n_pad = _round_up(n, 128)
    cin_p = _round_up(in_ch, 128)
    hid_p = _round_up(hid_ch, 128)
    out_p = _round_up(out_ch, 128)

    adj_p = build_adjacency_padded(edge_index, n, n_pad, use_mp)     # bf16

    x_p = jnp.zeros((n_pad, cin_p), jnp.bfloat16).at[:n, :in_ch].set(
        x.astype(jnp.bfloat16))
    w0t_p = jnp.zeros((cin_p, hid_p), jnp.bfloat16).at[:in_ch, :hid_ch].set(
        w0.T.astype(jnp.bfloat16))
    w1t_p = jnp.zeros((hid_p, out_p), jnp.bfloat16).at[:hid_ch, :out_ch].set(
        w1.T.astype(jnp.bfloat16))
    b0_p = jnp.zeros((1, hid_p), jnp.float32).at[0, :hid_ch].set(b0)
    b1_p = jnp.zeros((1, out_p), jnp.float32).at[0, :out_ch].set(b1)

    # TODO(synk): training-mode Gaussian noise injection (inject_noise) and
    #             dropout are stochastic and inactive in eval; omitted here.
    if allow_fused_small and n_pad <= _SMALL_FUSED_MAX_NODES:
        # Both layers in a single pallas_call; adjacency read from HBM once.
        y = _fused_two_layer(adj_p, x_p, w0t_p, b0_p, w1t_p, b1_p,
                             out_dtype=jnp.float32)
    else:
        h = _gcn_layer(adj_p, x_p, w0t_p, b0_p,
                       apply_relu=True, out_dtype=jnp.bfloat16)
        y = _gcn_layer(adj_p, h, w1t_p, b1_p,
                       apply_relu=False, out_dtype=jnp.float32)

    return y[:n, :out_ch]

    # TODO(synk): for truly sparse graphs, replace the dense A_hat with a
    #             scalar-prefetch (CSR / neighbor-list) blocked SpMM.


def _reference_forward(x, edge_index, params, use_mp=True):
    """Pure-JAX f32 reference (eval semantics)."""
    w0, b0, w1, b1 = params
    n = x.shape[0]
    row, col = edge_index[0], edge_index[1]
    a = jnp.zeros((n, n), jnp.float32).at[row, col].add(1.0) + jnp.eye(n)
    deg = a.sum(axis=1)
    dis = jnp.where(deg > 0, 1.0 / jnp.sqrt(deg), 0.0)
    adj = dis[:, None] * a * dis[None, :]
    if not use_mp:
        adj = jnp.eye(n, dtype=jnp.float32)
    h = jnp.maximum(adj @ (x @ w0.T) + b0, 0.0)
    return adj @ (h @ w1.T) + b1


# --------------------------------------------------------------------------
# Demo / self-check
# --------------------------------------------------------------------------

if __name__ == "__main__":
    key = jax.random.PRNGKey(0)
    k_x, k_e, k_w0, k_w1, k_x2, k_e2 = jax.random.split(key, 6)

    n_nodes, in_ch, hidden_ch, out_ch = 16, 8, 32, 8

    # Node features and a random symmetrized edge_index of shape (2, E).
    x = jax.random.normal(k_x, (n_nodes, in_ch), jnp.float32)
    src = jax.random.randint(k_e, (24,), 0, n_nodes)
    dst = jnp.roll(src, 7)
    edge_index = jnp.stack([jnp.concatenate([src, dst]),
                            jnp.concatenate([dst, src])]).astype(jnp.int32)

    # Deterministic parameter init matching reset_parameters():
    #   xavier_uniform_(weight, gain=1.414); zeros_(bias)
    w0 = xavier_uniform(k_w0, (hidden_ch, in_ch))     # fcs[0].weight
    b0 = jnp.zeros((hidden_ch,), jnp.float32)         # fcs[0].bias
    w1 = xavier_uniform(k_w1, (out_ch, hidden_ch))    # fcs[1].weight
    b1 = jnp.zeros((out_ch,), jnp.float32)            # fcs[1].bias
    params = (w0, b0, w1, b1)

    ref = _reference_forward(x, edge_index, params)

    # Fused two-layer small-graph path.
    out_fused = jax.block_until_ready(
        my_noisy_gcn_forward(x, edge_index, params, use_mp=True))
    assert out_fused.shape == (n_nodes, out_ch)
    assert out_fused.dtype == jnp.float32
    err = float(jnp.max(jnp.abs(out_fused - ref)))
    assert err < 1e-1, "fused path max abs err = %f" % err

    # General tiled per-layer path on the same graph.
    out_tiled = jax.block_until_ready(
        my_noisy_gcn_forward(x, edge_index, params, use_mp=True,
                             allow_fused_small=False))
    err = float(jnp.max(jnp.abs(out_tiled - ref)))
    assert err < 1e-1, "tiled path max abs err = %f" % err

    # A slightly larger graph so the tiled path exercises a real multi-tile
    # grid (n_pad=384 -> 3 row tiles x 3 reduction steps).
    n2 = 300
    x2 = jax.random.normal(k_x2, (n2, in_ch), jnp.float32)
    src2 = jax.random.randint(k_e2, (600,), 0, n2)
    dst2 = jnp.roll(src2, 113)
    edge_index2 = jnp.stack([jnp.concatenate([src2, dst2]),
                             jnp.concatenate([dst2, src2])]).astype(jnp.int32)
    ref2 = _reference_forward(x2, edge_index2, params)
    out2 = jax.block_until_ready(
        my_noisy_gcn_forward(x2, edge_index2, params, use_mp=True,
                             allow_fused_small=False))
    err2 = float(jnp.max(jnp.abs(out2 - ref2)))
    assert err2 < 1.5e-1, "tiled (multi-tile) path max abs err = %f" % err2

    print("KERNEL_OK")
</pallas_src>

<mosaic_0001>
module attributes {stable_mosaic.version = 11 : i64} {
  func.func @fused_two_layer_kernel(%arg0: i32, %arg1: memref<128x128xbf16, #tpu.memory_space<vmem>>, %arg2: memref<128x128xbf16, #tpu.memory_space<vmem>>, %arg3: memref<128x128xbf16, #tpu.memory_space<vmem>>, %arg4: memref<1x128xf32, #tpu.memory_space<vmem>>, %arg5: memref<128x128xbf16, #tpu.memory_space<vmem>>, %arg6: memref<1x128xf32, #tpu.memory_space<vmem>>, %arg7: memref<128x128xf32, #tpu.memory_space<vmem>>, %arg8: memref<128x128xbf16, #tpu.memory_space<vmem>>) attributes {dimension_semantics = [#tpu.dimension_semantics<arbitrary>], iteration_bounds = array<i64: 1>, scalar_prefetch = 0 : i64, scratch_operands = 1 : i64, tpu.core_type = #tpu.core_type<tc>, window_params = [{pipeline_mode = #tpu.pipeline_mode<synchronous>, transform_indices = @transform_0, window_bounds = array<i64: 128, 128>}, {pipeline_mode = #tpu.pipeline_mode<synchronous>, transform_indices = @transform_1, window_bounds = array<i64: 128, 128>}, {pipeline_mode = #tpu.pipeline_mode<synchronous>, transform_indices = @transform_2, window_bounds = array<i64: 128, 128>}, {pipeline_mode = #tpu.pipeline_mode<synchronous>, transform_indices = @transform_3, window_bounds = array<i64: 1, 128>}, {pipeline_mode = #tpu.pipeline_mode<synchronous>, transform_indices = @transform_4, window_bounds = array<i64: 128, 128>}, {pipeline_mode = #tpu.pipeline_mode<synchronous>, transform_indices = @transform_5, window_bounds = array<i64: 1, 128>}, {pipeline_mode = #tpu.pipeline_mode<synchronous>, transform_indices = @transform_6, window_bounds = array<i64: 128, 128>}]} {
    %c0 = arith.constant 0 : index
    %c0_0 = arith.constant 0 : index
    %0 = vector.load %arg1[%c0, %c0_0] : memref<128x128xbf16, #tpu.memory_space<vmem>>, vector<128x128xbf16>
    %c0_1 = arith.constant 0 : index
    %c0_2 = arith.constant 0 : index
    %1 = vector.load %arg2[%c0_1, %c0_2] : memref<128x128xbf16, #tpu.memory_space<vmem>>, vector<128x128xbf16>
    %cst = arith.constant dense<0.000000e+00> : vector<128x128xf32>
    %2 = tpu.matmul %0, %1, %cst {dimension_numbers = #tpu.dot_dimension_numbers<[1], [0], [0], [1], [0, 0, 1, 1], [], []>} : vector<128x128xbf16>, vector<128x128xbf16>, vector<128x128xf32> -> vector<128x128xf32>
    %3 = arith.truncf %2 : vector<128x128xf32> to vector<128x128xbf16>
    %c0_3 = arith.constant 0 : index
    %c0_4 = arith.constant 0 : index
    %4 = vector.load %arg3[%c0_3, %c0_4] : memref<128x128xbf16, #tpu.memory_space<vmem>>, vector<128x128xbf16>
    %cst_5 = arith.constant dense<0.000000e+00> : vector<128x128xf32>
    %5 = tpu.matmul %3, %4, %cst_5 {dimension_numbers = #tpu.dot_dimension_numbers<[1], [0], [0], [1], [0, 0, 1, 1], [], []>} : vector<128x128xbf16>, vector<128x128xbf16>, vector<128x128xf32> -> vector<128x128xf32>
    %c0_6 = arith.constant 0 : index
    %c0_7 = arith.constant 0 : index
    %6 = vector.load %arg4[%c0_6, %c0_7] : memref<1x128xf32, #tpu.memory_space<vmem>>, vector<1x128xf32>
    %7 = vector.broadcast %6 : vector<1x128xf32> to vector<128x128xf32>
    %8 = arith.addf %5, %7 : vector<128x128xf32>
    %cst_8 = arith.constant 0.000000e+00 : f32
    %9 = vector.broadcast %cst_8 : f32 to vector<128x128xf32>
    %10 = arith.maximumf %8, %9 : vector<128x128xf32>
    %11 = arith.truncf %10 : vector<128x128xf32> to vector<128x128xbf16>
    %c0_9 = arith.constant 0 : index
    %c0_10 = arith.constant 0 : index
    %12 = vector.load %arg8[%c0_9, %c0_10] : memref<128x128xbf16, #tpu.memory_space<vmem>>, vector<128x128xbf16>
    tpu.vector_store %arg8[%c0_9, %c0_10], %11 {strides = array<i32>} : memref<128x128xbf16, #tpu.memory_space<vmem>>, vector<128x128xbf16>,
    %c0_11 = arith.constant 0 : index
    %c0_12 = arith.constant 0 : index
    %13 = vector.load %arg8[%c0_11, %c0_12] : memref<128x128xbf16, #tpu.memory_space<vmem>>, vector<128x128xbf16>
    %cst_13 = arith.constant dense<0.000000e+00> : vector<128x128xf32>
    %14 = tpu.matmul %0, %13, %cst_13 {dimension_numbers = #tpu.dot_dimension_numbers<[1], [0], [0], [1], [0, 0, 1, 1], [], []>} : vector<128x128xbf16>, vector<128x128xbf16>, vector<128x128xf32> -> vector<128x128xf32>
    %15 = arith.truncf %14 : vector<128x128xf32> to vector<128x128xbf16>
    %c0_14 = arith.constant 0 : index
    %c0_15 = arith.constant 0 : index
    %16 = vector.load %arg5[%c0_14, %c0_15] : memref<128x128xbf16, #tpu.memory_space<vmem>>, vector<128x128xbf16>
    %cst_16 = arith.constant dense<0.000000e+00> : vector<128x128xf32>
    %17 = tpu.matmul %15, %16, %cst_16 {dimension_numbers = #tpu.dot_dimension_numbers<[1], [0], [0], [1], [0, 0, 1, 1], [], []>} : vector<128x128xbf16>, vector<128x128xbf16>, vector<128x128xf32> -> vector<128x128xf32>
    %c0_17 = arith.constant 0 : index
    %c0_18 = arith.constant 0 : index
    %18 = vector.load %arg6[%c0_17, %c0_18] : memref<1x128xf32, #tpu.memory_space<vmem>>, vector<1x128xf32>
    %19 = vector.broadcast %18 : vector<1x128xf32> to vector<128x128xf32>
    %20 = arith.addf %17, %19 : vector<128x128xf32>
    %c0_19 = arith.constant 0 : index
    %c0_20 = arith.constant 0 : index
    %21 = vector.load %arg7[%c0_19, %c0_20] : memref<128x128xf32, #tpu.memory_space<vmem>>, vector<128x128xf32>
    tpu.vector_store %arg7[%c0_19, %c0_20], %20 {strides = array<i32>} : memref<128x128xf32, #tpu.memory_space<vmem>>, vector<128x128xf32>,
    return
  }
  func.func @transform_0(%arg0: i32) -> (i32, i32) {
    %c0_i32 = arith.constant 0 : i32
    %c0_i32_0 = arith.constant 0 : i32
    %c0_i32_1 = arith.constant 0 : i32
    return %c0_i32, %c0_i32_0 : i32, i32
  }
  func.func @transform_1(%arg0: i32) -> (i32, i32) {
    %c0_i32 = arith.constant 0 : i32
    %c0_i32_0 = arith.constant 0 : i32
    %c0_i32_1 = arith.constant 0 : i32
    return %c0_i32, %c0_i32_0 : i32, i32
  }
  func.func @transform_2(%arg0: i32) -> (i32, i32) {
    %c0_i32 = arith.constant 0 : i32
    %c0_i32_0 = arith.constant 0 : i32
    %c0_i32_1 = arith.constant 0 : i32
    return %c0_i32, %c0_i32_0 : i32, i32
  }
  func.func @transform_3(%arg0: i32) -> (i32, i32) {
    %c0_i32 = arith.constant 0 : i32
    %c0_i32_0 = arith.constant 0 : i32
    %c0_i32_1 = arith.constant 0 : i32
    return %c0_i32, %c0_i32_0 : i32, i32
  }
  func.func @transform_4(%arg0: i32) -> (i32, i32) {
    %c0_i32 = arith.constant 0 : i32
    %c0_i32_0 = arith.constant 0 : i32
    %c0_i32_1 = arith.constant 0 : i32
    return %c0_i32, %c0_i32_0 : i32, i32
  }
  func.func @transform_5(%arg0: i32) -> (i32, i32) {
    %c0_i32 = arith.constant 0 : i32
    %c0_i32_0 = arith.constant 0 : i32
    %c0_i32_1 = arith.constant 0 : i32
    return %c0_i32, %c0_i32_0 : i32, i32
  }
  func.func @transform_6(%arg0: i32) -> (i32, i32) {
    %c0_i32 = arith.constant 0 : i32
    %c0_i32_0 = arith.constant 0 : i32
    %c0_i32_1 = arith.constant 0 : i32
    return %c0_i32, %c0_i32_0 : i32, i32
  }
}

</mosaic_0001>

<llo_original>
// kernel: tpu_custom_call.1
$region0: #{tpu_custom_call.1}
  #allocation0 [shape = 'u32[]', space=smem, size = 0x4, offset = 0x4, fixed_abs, tag = 'smem constant byte address 0x4 - core index']
  #allocation1 [shape = 'u32[144,128]{1,0:T(1,128)}', space=vmem, size = 0x12000, scoped, tag = 'internal scratch']
  #allocation2 [shape = 'bf16[128,128]{1,0:T(8,128)(2,1)}', space=vmem, size = 0x8000, scoped, tag = 'scratch operand']
  %s0 = inlined_call_operand.hbm [shape: bf16[128,128], index: 0, kind: input, shape index: {}]
  %s1 = inlined_call_operand.hbm [shape: bf16[128,128], index: 1, kind: input, shape index: {}]
  %s2 = inlined_call_operand.hbm [shape: bf16[128,128], index: 2, kind: input, shape index: {}]
  %s3 = inlined_call_operand.vmem [shape: f32[1,128], index: 3, kind: input, shape index: {}]
  %s4 = inlined_call_operand.hbm [shape: bf16[128,128], index: 4, kind: input, shape index: {}]
  %s5 = inlined_call_operand.vmem [shape: f32[1,128], index: 5, kind: input, shape index: {}]
  %s6 = inlined_call_operand.hbm [shape: f32[128,128], index: 6, kind: output, shape index: {}]
  %s7 = sld [smem:[#allocation0]]
  $region50: #{tpu_custom_call.1} parent=0
    _
  %s9 = ssub.s32 1, %s7
  %s10 = scalar_select 0, %s9, %s7
  $region1: #{tpu_custom_call.1} parent=0
    #allocation3 [shape = 'u8[32768]{0}', space=vmem, size = 0x8000, scoped, tag = 'input window, operand 0, single buffered']
    #allocation4 [shape = 's32[1]{0}', space=sflag, size = 0x4, scoped, tag = 'scoped memory for tpu_custom_call.1']
    #allocation5 [shape = 's32[1]{0}', space=sflag, size = 0x4, scoped, tag = 'scoped memory for tpu_custom_call.1']
    #allocation6 [shape = 'u8[32768]{0}', space=vmem, size = 0x8000, scoped, tag = 'input window, operand 1, single buffered']
    #allocation7 [shape = 's32[1]{0}', space=sflag, size = 0x4, scoped, tag = 'scoped memory for tpu_custom_call.1']
    #allocation8 [shape = 'u8[32768]{0}', space=vmem, size = 0x8000, scoped, tag = 'input window, operand 2, single buffered']
    #allocation9 [shape = 'u8[32768]{0}', space=vmem, size = 0x8000, scoped, tag = 'input window, operand 4, single buffered']
    #allocation10 [shape = 's32[1]{0}', space=sflag, size = 0x4, scoped, tag = 'scoped memory for tpu_custom_call.1']
    #allocation11 [shape = 'u8[65536]{0}', space=vmem, size = 0x10000, scoped, tag = 'output window, operand 0, single buffered']
    %11 = vsyncpa [#allocation4], 0
    %12 = vsyncpa [#allocation7], 0
    %13 = vsyncpa [#allocation10], 0
    %14 = vsyncpa [#allocation5], 0
    // Predicated region
    $region2: #{tpu_custom_call.1} parent=1 // pred_check
      _
    $region3: #{tpu_custom_call.1} parent=1 // pred_check_branch
      %16 = sbr.rel (0) target = $region5
    $region4: #{tpu_custom_call.1} parent=1 // pred_region
      %s18 = ssub.s32 1024, 1024
      %19 = vsyncadd [#allocation4], %s18
      %s20 = sshll.u32 [#allocation3], 4
      %s21 = int_to_ptr.vmem [resolvable:$true] %s20
      %26 = dma.hbm_to_vmem [thread:$0]  %s0, 1024, %s21, [#allocation4], 64, 64, 4
    $region5: #{tpu_custom_call.1} parent=1 // pred_fallthru
      _
    // Predicated region
    $region6: #{tpu_custom_call.1} parent=1 // pred_check
      _
    $region7: #{tpu_custom_call.1} parent=1 // pred_check_branch
      %28 = sbr.rel (0) target = $region9
    $region8: #{tpu_custom_call.1} parent=1 // pred_region
      %s30 = ssub.s32 1024, 1024
      %31 = vsyncadd [#allocation7], %s30
      %s32 = sshll.u32 [#allocation6], 4
      %s33 = int_to_ptr.vmem [resolvable:$true] %s32
      %38 = dma.hbm_to_vmem [thread:$0]  %s1, 1024, %s33, [#allocation7], 64, 64, 4
    $region9: #{tpu_custom_call.1} parent=1 // pred_fallthru
      _
    // Predicated region
    $region10: #{tpu_custom_call.1} parent=1 // pred_check
      _
    $region11: #{tpu_custom_call.1} parent=1 // pred_check_branch
      %40 = sbr.rel (0) target = $region13
    $region12: #{tpu_custom_call.1} parent=1 // pred_region
      %s42 = ssub.s32 1024, 1024
      %43 = vsyncadd [#allocation7], %s42
      %s44 = sshll.u32 [#allocation8], 4
      %s45 = int_to_ptr.vmem [resolvable:$true] %s44
      %50 = dma.hbm_to_vmem [thread:$0]  %s2, 1024, %s45, [#allocation7], 64, 64, 4
    $region13: #{tpu_custom_call.1} parent=1 // pred_fallthru
      _
    // Predicated region
    $region14: #{tpu_custom_call.1} parent=1 // pred_check
      _
    $region15: #{tpu_custom_call.1} parent=1 // pred_check_branch
      %52 = sbr.rel (0) target = $region17
    $region16: #{tpu_custom_call.1} parent=1 // pred_region
      _
    $region17: #{tpu_custom_call.1} parent=1 // pred_fallthru
      _
    // Predicated region
    $region18: #{tpu_custom_call.1} parent=1 // pred_check
      _
    $region19: #{tpu_custom_call.1} parent=1 // pred_check_branch
      %54 = sbr.rel (0) target = $region21
    $region20: #{tpu_custom_call.1} parent=1 // pred_region
      %s56 = ssub.s32 1024, 1024
      %57 = vsyncadd [#allocation10], %s56
      %s58 = sshll.u32 [#allocation9], 4
      %s59 = int_to_ptr.vmem [resolvable:$true] %s58
      %64 = dma.hbm_to_vmem [thread:$0]  %s4, 1024, %s59, [#allocation10], 64, 64, 4
    $region21: #{tpu_custom_call.1} parent=1 // pred_fallthru
      _
    // Predicated region
    $region22: #{tpu_custom_call.1} parent=1 // pred_check
      _
    $region23: #{tpu_custom_call.1} parent=1 // pred_check_branch
      %66 = sbr.rel (0) target = $region25
    $region24: #{tpu_custom_call.1} parent=1 // pred_region
      _
    $region25: #{tpu_custom_call.1} parent=1 // pred_fallthru
      _
    // Predicated region
    $region26: #{tpu_custom_call.1} parent=1 // pred_check
      _
    $region27: #{tpu_custom_call.1} parent=1 // pred_check_branch
      %68 = sbr.rel (0) target = $region29
    $region28: #{tpu_custom_call.1} parent=1 // pred_region
      %69 = dma.done [#allocation4], 1024
    $region29: #{tpu_custom_call.1} parent=1 // pred_fallthru
      _
    // Predicated region
    $region30: #{tpu_custom_call.1} parent=1 // pred_check
      _
    $region31: #{tpu_custom_call.1} parent=1 // pred_check_branch
      %71 = sbr.rel (0) target = $region33
    $region32: #{tpu_custom_call.1} parent=1 // pred_region
      %72 = dma.done [#allocation7], 1024
    $region33: #{tpu_custom_call.1} parent=1 // pred_fallthru
      _
    // Predicated region
    $region34: #{tpu_custom_call.1} parent=1 // pred_check
      _
    $region35: #{tpu_custom_call.1} parent=1 // pred_check_branch
      %74 = sbr.rel (0) target = $region37
    $region36: #{tpu_custom_call.1} parent=1 // pred_region
      %75 = dma.done [#allocation7], 1024
    $region37: #{tpu_custom_call.1} parent=1 // pred_fallthru
      _
    // Predicated region
    $region38: #{tpu_custom_call.1} parent=1 // pred_check
      _
    $region39: #{tpu_custom_call.1} parent=1 // pred_check_branch
      %77 = sbr.rel (0) target = $region41
    $region40: #{tpu_custom_call.1} parent=1 // pred_region
      %78 = dma.done [#allocation10], 1024
    $region41: #{tpu_custom_call.1} parent=1 // pred_fallthru
      _
    %v80 = vld [vmem:[#allocation3] sm:$0xf]
    %v81 = vld [vmem:[#allocation3 + $0x4] sm:$0xf]
    %v82 = vld [vmem:[#allocation3 + $0x8] sm:$0xf]
    %v83 = vld [vmem:[#allocation3 + $0xc] sm:$0xf]
    %v84 = vld [vmem:[#allocation3 + $0x10] sm:$0xf]
    %v85 = vld [vmem:[#allocation3 + $0x14] sm:$0xf]
    %v86 = vld [vmem:[#allocation3 + $0x18] sm:$0xf]
    %v87 = vld [vmem:[#allocation3 + $0x1c] sm:$0xf]
    %v88 = vld [vmem:[#allocation3 + $0x20] sm:$0xf]
    %v89 = vld [vmem:[#allocation3 + $0x24] sm:$0xf]
    %v90 = vld [vmem:[#allocation3 + $0x28] sm:$0xf]
    %v91 = vld [vmem:[#allocation3 + $0x2c] sm:$0xf]
    %v92 = vld [vmem:[#allocation3 + $0x30] sm:$0xf]
    %v93 = vld [vmem:[#allocation3 + $0x34] sm:$0xf]
    %v94 = vld [vmem:[#allocation3 + $0x38] sm:$0xf]
    %v95 = vld [vmem:[#allocation3 + $0x3c] sm:$0xf]
    %v96 = vld [vmem:[#allocation6] sm:$0xf]
    %v97 = vld [vmem:[#allocation6 + $0x4] sm:$0xf]
    %v98 = vld [vmem:[#allocation6 + $0x8] sm:$0xf]
    %v99 = vld [vmem:[#allocation6 + $0xc] sm:$0xf]
    %v100 = vld [vmem:[#allocation6 + $0x10] sm:$0xf]
    %v101 = vld [vmem:[#allocation6 + $0x14] sm:$0xf]
    %v102 = vld [vmem:[#allocation6 + $0x18] sm:$0xf]
    %v103 = vld [vmem:[#allocation6 + $0x1c] sm:$0xf]
    %v104 = vld [vmem:[#allocation6 + $0x20] sm:$0xf]
    %v105 = vld [vmem:[#allocation6 + $0x24] sm:$0xf]
    %v106 = vld [vmem:[#allocation6 + $0x28] sm:$0xf]
    %v107 = vld [vmem:[#allocation6 + $0x2c] sm:$0xf]
    %v108 = vld [vmem:[#allocation6 + $0x30] sm:$0xf]
    %v109 = vld [vmem:[#allocation6 + $0x34] sm:$0xf]
    %v110 = vld [vmem:[#allocation6 + $0x38] sm:$0xf]
    %v111 = vld [vmem:[#allocation6 + $0x3c] sm:$0xf]
    %v128 = vunpack.c.l.b16 %v80
    %v129 = vunpack.c.l.b16 %v81
    %v130 = vunpack.c.l.b16 %v82
    %v131 = vunpack.c.l.b16 %v83
    %v132 = vunpack.c.l.b16 %v84
    %v133 = vunpack.c.l.b16 %v85
    %v134 = vunpack.c.l.b16 %v86
    %v135 = vunpack.c.l.b16 %v87
    %v136 = vunpack.c.l.b16 %v88
    %v137 = vunpack.c.l.b16 %v89
    %v138 = vunpack.c.l.b16 %v90
    %v139 = vunpack.c.l.b16 %v91
    %v140 = vunpack.c.l.b16 %v92
    %v141 = vunpack.c.l.b16 %v93
    %v142 = vunpack.c.l.b16 %v94
    %v143 = vunpack.c.l.b16 %v95
    %v144 = vpack.c.b16 %v129, %v128
    %v145 = vpack.c.b16 %v131, %v130
    %v146 = vpack.c.b16 %v133, %v132
    %v147 = vpack.c.b16 %v135, %v134
    %v148 = vpack.c.b16 %v137, %v136
    %v149 = vpack.c.b16 %v139, %v138
    %v150 = vpack.c.b16 %v141, %v140
    %v151 = vpack.c.b16 %v143, %v142
    %v176 = vunpack.c.l.b16 %v96
    %v177 = vunpack.c.l.b16 %v97
    %v178 = vunpack.c.l.b16 %v98
    %v179 = vunpack.c.l.b16 %v99
    %v180 = vunpack.c.l.b16 %v100
    %v181 = vunpack.c.l.b16 %v101
    %v182 = vunpack.c.l.b16 %v102
    %v183 = vunpack.c.l.b16 %v103
    %v184 = vunpack.c.l.b16 %v104
    %v185 = vunpack.c.l.b16 %v105
    %v186 = vunpack.c.l.b16 %v106
    %v187 = vunpack.c.l.b16 %v107
    %v188 = vunpack.c.l.b16 %v108
    %v189 = vunpack.c.l.b16 %v109
    %v190 = vunpack.c.l.b16 %v110
    %v191 = vunpack.c.l.b16 %v111
    %v192 = vpack.c.b16 %v177, %v176
    %v193 = vpack.c.b16 %v179, %v178
    %v194 = vpack.c.b16 %v181, %v180
    %v195 = vpack.c.b16 %v183, %v182
    %v196 = vpack.c.b16 %v185, %v184
    %v197 = vpack.c.b16 %v187, %v186
    %v198 = vpack.c.b16 %v189, %v188
    %v199 = vpack.c.b16 %v191, %v190
    %208 = vmatprep.subr.bf16.mxu0 0
    %209 = vmatpush1.bf16.msra.mxu0 %v199
    %210 = vmatprep.subr.bf16.mxu0 0
    %211 = vmatpush1.bf16.msra.mxu0 %v198
    %212 = vmatprep.subr.bf16.mxu0 0
    %213 = vmatpush1.bf16.msra.mxu0 %v197
    %214 = vmatprep.subr.bf16.mxu0 0
    %215 = vmatpush1.bf16.msra.mxu0 %v196
    %216 = vmatprep.subr.bf16.mxu0 0
    %217 = vmatpush1.bf16.msra.mxu0 %v195
    %218 = vmatprep.subr.bf16.mxu0 0
    %219 = vmatpush1.bf16.msra.mxu0 %v194
    %220 = vmatprep.subr.bf16.mxu0 0
    %221 = vmatpush1.bf16.msra.mxu0 %v193
    %222 = vmatprep.subr.bf16.mxu0 0
    %223 = vmatpush1.bf16.msra.mxu0 %v192
    %224 = vmatprep.subr.bf16.mxu0 0
    %225 = vmatpush2.bf16.msra.mxu0 0
    %226 = vmatprep.subr.bf16.mxu0 0
    %227 = vmatpush2.bf16.msra.mxu0 0
    %228 = vmatprep.subr.bf16.mxu0 0
    %229 = vmatpush2.bf16.msra.mxu0 0
    %230 = vmatprep.subr.bf16.mxu0 0
    %231 = vmatpush2.bf16.msra.mxu0 0
    %232 = vmatprep.subr.bf16.mxu0 0
    %233 = vmatpush2.bf16.msra.mxu0 0
    %234 = vmatprep.subr.bf16.mxu0 0
    %235 = vmatpush2.bf16.msra.mxu0 0
    %236 = vmatprep.subr.bf16.mxu0 0
    %237 = vmatpush2.bf16.msra.mxu0 0
    %238 = vmatprep.subr.bf16.mxu0 0
    %239 = vmatpush2.bf16.msra.mxu0 0
    %240 = vmatprep.mubr.bf16.mxu0 0
    %241 = vmatmul.mubr.bf16.gmra.mxu0 %v144
    %v242 = vpop.f32.mrf.mxu0
    %v243 = vadd.f32 0.0, %v242
    %v244 = vpop.f32.mrf.mxu0
    %v245 = vpop.f32.mrf.mxu0
    %v246 = vadd.f32 0.0, %v245
    %v247 = vpop.f32.mrf.mxu0
    %248 = vmatprep.mubr.bf16.mxu0 0
    %249 = vmatmul.mubr.bf16.gmra.mxu0 %v145
    %v250 = vpop.f32.mrf.mxu0
    %v251 = vadd.f32 0.0, %v250
    %v252 = vpop.f32.mrf.mxu0
    %v253 = vpop.f32.mrf.mxu0
    %v254 = vadd.f32 0.0, %v253
    %v255 = vpop.f32.mrf.mxu0
    %256 = vmatprep.mubr.bf16.mxu0 0
    %257 = vmatmul.mubr.bf16.gmra.mxu0 %v146
    %v258 = vpop.f32.mrf.mxu0
    %v259 = vadd.f32 0.0, %v258
    %v260 = vpop.f32.mrf.mxu0
    %v261 = vpop.f32.mrf.mxu0
    %v262 = vadd.f32 0.0, %v261
    %v263 = vpop.f32.mrf.mxu0
    %264 = vmatprep.mubr.bf16.mxu0 0
    %265 = vmatmul.mubr.bf16.gmra.mxu0 %v147
    %v266 = vpop.f32.mrf.mxu0
    %v267 = vadd.f32 0.0, %v266
    %v268 = vpop.f32.mrf.mxu0
    %v269 = vpop.f32.mrf.mxu0
    %v270 = vadd.f32 0.0, %v269
    %v271 = vpop.f32.mrf.mxu0
    %272 = vmatprep.mubr.bf16.mxu0 0
    %273 = vmatmul.mubr.bf16.gmra.mxu0 %v148
    %v274 = vpop.f32.mrf.mxu0
    %v275 = vadd.f32 0.0, %v274
    %v276 = vpop.f32.mrf.mxu0
    %v277 = vpop.f32.mrf.mxu0
    %v278 = vadd.f32 0.0, %v277
    %v279 = vpop.f32.mrf.mxu0
    %280 = vmatprep.mubr.bf16.mxu0 0
    %281 = vmatmul.mubr.bf16.gmra.mxu0 %v149
    %v282 = vpop.f32.mrf.mxu0
    %v283 = vadd.f32 0.0, %v282
    %v284 = vpop.f32.mrf.mxu0
    %v285 = vpop.f32.mrf.mxu0
    %v286 = vadd.f32 0.0, %v285
    %v287 = vpop.f32.mrf.mxu0
    %288 = vmatprep.mubr.bf16.mxu0 0
    %289 = vmatmul.mubr.bf16.gmra.mxu0 %v150
    %v290 = vpop.f32.mrf.mxu0
    %v291 = vadd.f32 0.0, %v290
    %v292 = vpop.f32.mrf.mxu0
    %v293 = vpop.f32.mrf.mxu0
    %v294 = vadd.f32 0.0, %v293
    %v295 = vpop.f32.mrf.mxu0
    %296 = vmatprep.mubr.bf16.mxu0 0
    %297 = vmatmul.mubr.bf16.gmra.mxu0 %v151
    %v298 = vpop.f32.mrf.mxu0
    %v299 = vadd.f32 0.0, %v298
    %v300 = vpop.f32.mrf.mxu0
    %v301 = vpop.f32.mrf.mxu0
    %v302 = vadd.f32 0.0, %v301
    %v303 = vpop.f32.mrf.mxu0
    %304 = vdwg.mxu0
    %v305 = vpack.c.bf16 %v246, %v243
    %v306 = vpack.c.bf16 %v254, %v251
    %v307 = vpack.c.bf16 %v262, %v259
    %v308 = vpack.c.bf16 %v270, %v267
    %v309 = vpack.c.bf16 %v278, %v275
    %v310 = vpack.c.bf16 %v286, %v283
    %v311 = vpack.c.bf16 %v294, %v291
    %v312 = vpack.c.bf16 %v302, %v299
    %v313 = vld [vmem:[#allocation8] sm:$0xf]
    %v314 = vld [vmem:[#allocation8 + $0x4] sm:$0xf]
    %v315 = vld [vmem:[#allocation8 + $0x8] sm:$0xf]
    %v316 = vld [vmem:[#allocation8 + $0xc] sm:$0xf]
    %v317 = vld [vmem:[#allocation8 + $0x10] sm:$0xf]
    %v318 = vld [vmem:[#allocation8 + $0x14] sm:$0xf]
    %v319 = vld [vmem:[#allocation8 + $0x18] sm:$0xf]
    %v320 = vld [vmem:[#allocation8 + $0x1c] sm:$0xf]
    %v321 = vld [vmem:[#allocation8 + $0x20] sm:$0xf]
    %v322 = vld [vmem:[#allocation8 + $0x24] sm:$0xf]
    %v323 = vld [vmem:[#allocation8 + $0x28] sm:$0xf]
    %v324 = vld [vmem:[#allocation8 + $0x2c] sm:$0xf]
    %v325 = vld [vmem:[#allocation8 + $0x30] sm:$0xf]
    %v326 = vld [vmem:[#allocation8 + $0x34] sm:$0xf]
    %v327 = vld [vmem:[#allocation8 + $0x38] sm:$0xf]
    %v328 = vld [vmem:[#allocation8 + $0x3c] sm:$0xf]
    %v329 = vld [vmem:[%s3] sm:$0x1]
    %v331 = vlaneseq
    %v332 = vshrl.u32 %v331, 7
    %v333 = vsub.s32 0, %v332
    %v334 = vrot.slane %v329, %v333
    %v352 = vunpack.c.l.b16 %v313
    %v353 = vunpack.c.l.b16 %v314
    %v354 = vunpack.c.l.b16 %v315
    %v355 = vunpack.c.l.b16 %v316
    %v356 = vunpack.c.l.b16 %v317
    %v357 = vunpack.c.l.b16 %v318
    %v358 = vunpack.c.l.b16 %v319
    %v359 = vunpack.c.l.b16 %v320
    %v360 = vunpack.c.l.b16 %v321
    %v361 = vunpack.c.l.b16 %v322
    %v362 = vunpack.c.l.b16 %v323
    %v363 = vunpack.c.l.b16 %v324
    %v364 = vunpack.c.l.b16 %v325
    %v365 = vunpack.c.l.b16 %v326
    %v366 = vunpack.c.l.b16 %v327
    %v367 = vunpack.c.l.b16 %v328
    %v368 = vpack.c.b16 %v353, %v352
    %v369 = vpack.c.b16 %v355, %v354
    %v370 = vpack.c.b16 %v357, %v356
    %v371 = vpack.c.b16 %v359, %v358
    %v372 = vpack.c.b16 %v361, %v360
    %v373 = vpack.c.b16 %v363, %v362
    %v374 = vpack.c.b16 %v365, %v364
    %v375 = vpack.c.b16 %v367, %v366
    %384 = vmatprep.subr.bf16.mxu0 0
    %385 = vmatpush1.bf16.msra.mxu0 %v375
    %386 = vmatprep.subr.bf16.mxu0 0
    %387 = vmatpush1.bf16.msra.mxu0 %v374
    %388 = vmatprep.subr.bf16.mxu0 0
    %389 = vmatpush1.bf16.msra.mxu0 %v373
    %390 = vmatprep.subr.bf16.mxu0 0
    %391 = vmatpush1.bf16.msra.mxu0 %v372
    %392 = vmatprep.subr.bf16.mxu0 0
    %393 = vmatpush1.bf16.msra.mxu0 %v371
    %394 = vmatprep.subr.bf16.mxu0 0
    %395 = vmatpush1.bf16.msra.mxu0 %v370
    %396 = vmatprep.subr.bf16.mxu0 0
    %397 = vmatpush1.bf16.msra.mxu0 %v369
    %398 = vmatprep.subr.bf16.mxu0 0
    %399 = vmatpush1.bf16.msra.mxu0 %v368
    %400 = vmatprep.subr.bf16.mxu0 0
    %401 = vmatpush2.bf16.msra.mxu0 0
    %402 = vmatprep.subr.bf16.mxu0 0
    %403 = vmatpush2.bf16.msra.mxu0 0
    %404 = vmatprep.subr.bf16.mxu0 0
    %405 = vmatpush2.bf16.msra.mxu0 0
    %406 = vmatprep.subr.bf16.mxu0 0
    %407 = vmatpush2.bf16.msra.mxu0 0
    %408 = vmatprep.subr.bf16.mxu0 0
    %409 = vmatpush2.bf16.msra.mxu0 0
    %410 = vmatprep.subr.bf16.mxu0 0
    %411 = vmatpush2.bf16.msra.mxu0 0
    %412 = vmatprep.subr.bf16.mxu0 0
    %413 = vmatpush2.bf16.msra.mxu0 0
    %414 = vmatprep.subr.bf16.mxu0 0
    %415 = vmatpush2.bf16.msra.mxu0 0
    %416 = vmatprep.mubr.bf16.mxu0 0
    %417 = vmatmul.mubr.bf16.gmra.mxu0 %v305
    %v418 = vpop.f32.mrf.mxu0
    %v419 = vadd.f32 %v334, %v418
    %v420 = vpop.f32.mrf.mxu0
    %v421 = vpop.f32.mrf.mxu0
    %v422 = vadd.f32 %v334, %v421
    %v423 = vpop.f32.mrf.mxu0
    %424 = vmatprep.mubr.bf16.mxu0 0
    %425 = vmatmul.mubr.bf16.gmra.mxu0 %v306
    %v426 = vpop.f32.mrf.mxu0
    %v427 = vadd.f32 %v334, %v426
    %v428 = vpop.f32.mrf.mxu0
    %v429 = vpop.f32.mrf.mxu0
    %v430 = vadd.f32 %v334, %v429
    %v431 = vpop.f32.mrf.mxu0
    %432 = vmatprep.mubr.bf16.mxu0 0
    %433 = vmatmul.mubr.bf16.gmra.mxu0 %v307
    %v434 = vpop.f32.mrf.mxu0
    %v435 = vadd.f32 %v334, %v434
    %v436 = vpop.f32.mrf.mxu0
    %v437 = vpop.f32.mrf.mxu0
    %v438 = vadd.f32 %v334, %v437
    %v439 = vpop.f32.mrf.mxu0
    %440 = vmatprep.mubr.bf16.mxu0 0
    %441 = vmatmul.mubr.bf16.gmra.mxu0 %v308
    %v442 = vpop.f32.mrf.mxu0
    %v443 = vadd.f32 %v334, %v442
    %v444 = vpop.f32.mrf.mxu0
    %v445 = vpop.f32.mrf.mxu0
    %v446 = vadd.f32 %v334, %v445
    %v447 = vpop.f32.mrf.mxu0
    %448 = vmatprep.mubr.bf16.mxu0 0
    %449 = vmatmul.mubr.bf16.gmra.mxu0 %v309
    %v450 = vpop.f32.mrf.mxu0
    %v451 = vadd.f32 %v334, %v450
    %v452 = vpop.f32.mrf.mxu0
    %v453 = vpop.f32.mrf.mxu0
    %v454 = vadd.f32 %v334, %v453
    %v455 = vpop.f32.mrf.mxu0
    %456 = vmatprep.mubr.bf16.mxu0 0
    %457 = vmatmul.mubr.bf16.gmra.mxu0 %v310
    %v458 = vpop.f32.mrf.mxu0
    %v459 = vadd.f32 %v334, %v458
    %v460 = vpop.f32.mrf.mxu0
    %v461 = vpop.f32.mrf.mxu0
    %v462 = vadd.f32 %v334, %v461
    %v463 = vpop.f32.mrf.mxu0
    %464 = vmatprep.mubr.bf16.mxu0 0
    %465 = vmatmul.mubr.bf16.gmra.mxu0 %v311
    %v466 = vpop.f32.mrf.mxu0
    %v467 = vadd.f32 %v334, %v466
    %v468 = vpop.f32.mrf.mxu0
    %v469 = vpop.f32.mrf.mxu0
    %v470 = vadd.f32 %v334, %v469
    %v471 = vpop.f32.mrf.mxu0
    %472 = vmatprep.mubr.bf16.mxu0 0
    %473 = vmatmul.mubr.bf16.gmra.mxu0 %v312
    %v474 = vpop.f32.mrf.mxu0
    %v475 = vadd.f32 %v334, %v474
    %v476 = vpop.f32.mrf.mxu0
    %v477 = vpop.f32.mrf.mxu0
    %v478 = vadd.f32 %v334, %v477
    %v479 = vpop.f32.mrf.mxu0
    %480 = vdwg.mxu0
    %v481 = vmax.f32 %v419, 0.0
    %v482 = vmax.f32 %v422, 0.0
    %v483 = vmax.f32 %v427, 0.0
    %v484 = vmax.f32 %v430, 0.0
    %v485 = vmax.f32 %v435, 0.0
    %v486 = vmax.f32 %v438, 0.0
    %v487 = vmax.f32 %v443, 0.0
    %v488 = vmax.f32 %v446, 0.0
    %v489 = vmax.f32 %v451, 0.0
    %v490 = vmax.f32 %v454, 0.0
    %v491 = vmax.f32 %v459, 0.0
    %v492 = vmax.f32 %v462, 0.0
    %v493 = vmax.f32 %v467, 0.0
    %v494 = vmax.f32 %v470, 0.0
    %v495 = vmax.f32 %v475, 0.0
    %v496 = vmax.f32 %v478, 0.0
    %v497 = vpack.c.bf16 %v482, %v481
    %v498 = vpack.c.bf16 %v484, %v483
    %v499 = vpack.c.bf16 %v486, %v485
    %v500 = vpack.c.bf16 %v488, %v487
    %v501 = vpack.c.bf16 %v490, %v489
    %v502 = vpack.c.bf16 %v492, %v491
    %v503 = vpack.c.bf16 %v494, %v493
    %v504 = vpack.c.bf16 %v496, %v495
    %v513 = vunpack.c.l.b16 %v497
    %v514 = vunpack.c.h.b16 %v497
    %v515 = vunpack.c.l.b16 %v498
    %v516 = vunpack.c.h.b16 %v498
    %v517 = vunpack.c.l.b16 %v499
    %v518 = vunpack.c.h.b16 %v499
    %v519 = vunpack.c.l.b16 %v500
    %v520 = vunpack.c.h.b16 %v500
    %v521 = vunpack.c.l.b16 %v501
    %v522 = vunpack.c.h.b16 %v501
    %v523 = vunpack.c.l.b16 %v502
    %v524 = vunpack.c.h.b16 %v502
    %v525 = vunpack.c.l.b16 %v503
    %v526 = vunpack.c.h.b16 %v503
    %v527 = vunpack.c.l.b16 %v504
    %v528 = vunpack.c.h.b16 %v504
    %v529 = vpack.c.b16 %v513, %v513
    %v530 = vpack.c.b16 %v514, %v514
    %v531 = vpack.c.b16 %v515, %v515
    %v532 = vpack.c.b16 %v516, %v516
    %v533 = vpack.c.b16 %v517, %v517
    %v534 = vpack.c.b16 %v518, %v518
    %v535 = vpack.c.b16 %v519, %v519
    %v536 = vpack.c.b16 %v520, %v520
    %v537 = vpack.c.b16 %v521, %v521
    %v538 = vpack.c.b16 %v522, %v522
    %v539 = vpack.c.b16 %v523, %v523
    %v540 = vpack.c.b16 %v524, %v524
    %v541 = vpack.c.b16 %v525, %v525
    %v542 = vpack.c.b16 %v526, %v526
    %v543 = vpack.c.b16 %v527, %v527
    %v544 = vpack.c.b16 %v528, %v528
    %561 = vst [vmem:[#allocation2] sm:$0xf] %v529
    %562 = vst [vmem:[#allocation2 + $0x4] sm:$0xf] %v530
    %563 = vst [vmem:[#allocation2 + $0x8] sm:$0xf] %v531
    %564 = vst [vmem:[#allocation2 + $0xc] sm:$0xf] %v532
    %565 = vst [vmem:[#allocation2 + $0x10] sm:$0xf] %v533
    %566 = vst [vmem:[#allocation2 + $0x14] sm:$0xf] %v534
    %567 = vst [vmem:[#allocation2 + $0x18] sm:$0xf] %v535
    %568 = vst [vmem:[#allocation2 + $0x1c] sm:$0xf] %v536
    %569 = vst [vmem:[#allocation2 + $0x20] sm:$0xf] %v537
    %570 = vst [vmem:[#allocation2 + $0x24] sm:$0xf] %v538
    %571 = vst [vmem:[#allocation2 + $0x28] sm:$0xf] %v539
    %572 = vst [vmem:[#allocation2 + $0x2c] sm:$0xf] %v540
    %573 = vst [vmem:[#allocation2 + $0x30] sm:$0xf] %v541
    %574 = vst [vmem:[#allocation2 + $0x34] sm:$0xf] %v542
    %575 = vst [vmem:[#allocation2 + $0x38] sm:$0xf] %v543
    %576 = vst [vmem:[#allocation2 + $0x3c] sm:$0xf] %v544
    %v577 = vld [vmem:[#allocation2] sm:$0xf]
    %v578 = vld [vmem:[#allocation2 + $0x4] sm:$0xf]
    %v579 = vld [vmem:[#allocation2 + $0x8] sm:$0xf]
    %v580 = vld [vmem:[#allocation2 + $0xc] sm:$0xf]
    %v581 = vld [vmem:[#allocation2 + $0x10] sm:$0xf]
    %v582 = vld [vmem:[#allocation2 + $0x14] sm:$0xf]
    %v583 = vld [vmem:[#allocation2 + $0x18] sm:$0xf]
    %v584 = vld [vmem:[#allocation2 + $0x1c] sm:$0xf]
    %v585 = vld [vmem:[#allocation2 + $0x20] sm:$0xf]
    %v586 = vld [vmem:[#allocation2 + $0x24] sm:$0xf]
    %v587 = vld [vmem:[#allocation2 + $0x28] sm:$0xf]
    %v588 = vld [vmem:[#allocation2 + $0x2c] sm:$0xf]
    %v589 = vld [vmem:[#allocation2 + $0x30] sm:$0xf]
    %v590 = vld [vmem:[#allocation2 + $0x34] sm:$0xf]
    %v591 = vld [vmem:[#allocation2 + $0x38] sm:$0xf]
    %v592 = vld [vmem:[#allocation2 + $0x3c] sm:$0xf]
    %v609 = vunpack.c.l.b16 %v577
    %v610 = vunpack.c.l.b16 %v578
    %v611 = vunpack.c.l.b16 %v579
    %v612 = vunpack.c.l.b16 %v580
    %v613 = vunpack.c.l.b16 %v581
    %v614 = vunpack.c.l.b16 %v582
    %v615 = vunpack.c.l.b16 %v583
    %v616 = vunpack.c.l.b16 %v584
    %v617 = vunpack.c.l.b16 %v585
    %v618 = vunpack.c.l.b16 %v586
    %v619 = vunpack.c.l.b16 %v587
    %v620 = vunpack.c.l.b16 %v588
    %v621 = vunpack.c.l.b16 %v589
    %v622 = vunpack.c.l.b16 %v590
    %v623 = vunpack.c.l.b16 %v591
    %v624 = vunpack.c.l.b16 %v592
    %v625 = vpack.c.b16 %v610, %v609
    %v626 = vpack.c.b16 %v612, %v611
    %v627 = vpack.c.b16 %v614, %v613
    %v628 = vpack.c.b16 %v616, %v615
    %v629 = vpack.c.b16 %v618, %v617
    %v630 = vpack.c.b16 %v620, %v619
    %v631 = vpack.c.b16 %v622, %v621
    %v632 = vpack.c.b16 %v624, %v623
    %641 = vmatprep.subr.bf16.mxu0 0
    %642 = vmatpush1.bf16.msra.mxu0 %v632
    %643 = vmatprep.subr.bf16.mxu0 0
    %644 = vmatpush1.bf16.msra.mxu0 %v631
    %645 = vmatprep.subr.bf16.mxu0 0
    %646 = vmatpush1.bf16.msra.mxu0 %v630
    %647 = vmatprep.subr.bf16.mxu0 0
    %648 = vmatpush1.bf16.msra.mxu0 %v629
    %649 = vmatprep.subr.bf16.mxu0 0
    %650 = vmatpush1.bf16.msra.mxu0 %v628
    %651 = vmatprep.subr.bf16.mxu0 0
    %652 = vmatpush1.bf16.msra.mxu0 %v627
    %653 = vmatprep.subr.bf16.mxu0 0
    %654 = vmatpush1.bf16.msra.mxu0 %v626
    %655 = vmatprep.subr.bf16.mxu0 0
    %656 = vmatpush1.bf16.msra.mxu0 %v625
    %657 = vmatprep.subr.bf16.mxu0 0
    %658 = vmatpush2.bf16.msra.mxu0 0
    %659 = vmatprep.subr.bf16.mxu0 0
    %660 = vmatpush2.bf16.msra.mxu0 0
    %661 = vmatprep.subr.bf16.mxu0 0
    %662 = vmatpush2.bf16.msra.mxu0 0
    %663 = vmatprep.subr.bf16.mxu0 0
    %664 = vmatpush2.bf16.msra.mxu0 0
    %665 = vmatprep.subr.bf16.mxu0 0
    %666 = vmatpush2.bf16.msra.mxu0 0
    %667 = vmatprep.subr.bf16.mxu0 0
    %668 = vmatpush2.bf16.msra.mxu0 0
    %669 = vmatprep.subr.bf16.mxu0 0
    %670 = vmatpush2.bf16.msra.mxu0 0
    %671 = vmatprep.subr.bf16.mxu0 0
    %672 = vmatpush2.bf16.msra.mxu0 0
    %673 = vmatprep.mubr.bf16.mxu0 0
    %674 = vmatmul.mubr.bf16.gmra.mxu0 %v144
    %v675 = vpop.f32.mrf.mxu0
    %v676 = vadd.f32 0.0, %v675
    %v677 = vpop.f32.mrf.mxu0
    %v678 = vpop.f32.mrf.mxu0
    %v679 = vadd.f32 0.0, %v678
    %v680 = vpop.f32.mrf.mxu0
    %681 = vmatprep.mubr.bf16.mxu0 0
    %682 = vmatmul.mubr.bf16.gmra.mxu0 %v145
    %v683 = vpop.f32.mrf.mxu0
    %v684 = vadd.f32 0.0, %v683
    %v685 = vpop.f32.mrf.mxu0
    %v686 = vpop.f32.mrf.mxu0
    %v687 = vadd.f32 0.0, %v686
    %v688 = vpop.f32.mrf.mxu0
    %689 = vmatprep.mubr.bf16.mxu0 0
    %690 = vmatmul.mubr.bf16.gmra.mxu0 %v146
    %v691 = vpop.f32.mrf.mxu0
    %v692 = vadd.f32 0.0, %v691
    %v693 = vpop.f32.mrf.mxu0
    %v694 = vpop.f32.mrf.mxu0
    %v695 = vadd.f32 0.0, %v694
    %v696 = vpop.f32.mrf.mxu0
    %697 = vmatprep.mubr.bf16.mxu0 0
    %698 = vmatmul.mubr.bf16.gmra.mxu0 %v147
    %v699 = vpop.f32.mrf.mxu0
    %v700 = vadd.f32 0.0, %v699
    %v701 = vpop.f32.mrf.mxu0
    %v702 = vpop.f32.mrf.mxu0
    %v703 = vadd.f32 0.0, %v702
    %v704 = vpop.f32.mrf.mxu0
    %705 = vmatprep.mubr.bf16.mxu0 0
    %706 = vmatmul.mubr.bf16.gmra.mxu0 %v148
    %v707 = vpop.f32.mrf.mxu0
    %v708 = vadd.f32 0.0, %v707
    %v709 = vpop.f32.mrf.mxu0
    %v710 = vpop.f32.mrf.mxu0
    %v711 = vadd.f32 0.0, %v710
    %v712 = vpop.f32.mrf.mxu0
    %713 = vmatprep.mubr.bf16.mxu0 0
    %714 = vmatmul.mubr.bf16.gmra.mxu0 %v149
    %v715 = vpop.f32.mrf.mxu0
    %v716 = vadd.f32 0.0, %v715
    %v717 = vpop.f32.mrf.mxu0
    %v718 = vpop.f32.mrf.mxu0
    %v719 = vadd.f32 0.0, %v718
    %v720 = vpop.f32.mrf.mxu0
    %721 = vmatprep.mubr.bf16.mxu0 0
    %722 = vmatmul.mubr.bf16.gmra.mxu0 %v150
    %v723 = vpop.f32.mrf.mxu0
    %v724 = vadd.f32 0.0, %v723
    %v725 = vpop.f32.mrf.mxu0
    %v726 = vpop.f32.mrf.mxu0
    %v727 = vadd.f32 0.0, %v726
    %v728 = vpop.f32.mrf.mxu0
    %729 = vmatprep.mubr.bf16.mxu0 0
    %730 = vmatmul.mubr.bf16.gmra.mxu0 %v151
    %v731 = vpop.f32.mrf.mxu0
    %v732 = vadd.f32 0.0, %v731
    %v733 = vpop.f32.mrf.mxu0
    %v734 = vpop.f32.mrf.mxu0
    %v735 = vadd.f32 0.0, %v734
    %v736 = vpop.f32.mrf.mxu0
    %737 = vdwg.mxu0
    %v738 = vpack.c.bf16 %v679, %v676
    %v739 = vpack.c.bf16 %v687, %v684
    %v740 = vpack.c.bf16 %v695, %v692
    %v741 = vpack.c.bf16 %v703, %v700
    %v742 = vpack.c.bf16 %v711, %v708
    %v743 = vpack.c.bf16 %v719, %v716
    %v744 = vpack.c.bf16 %v727, %v724
    %v745 = vpack.c.bf16 %v735, %v732
    %v746 = vld [vmem:[#allocation9] sm:$0xf]
    %v747 = vld [vmem:[#allocation9 + $0x4] sm:$0xf]
    %v748 = vld [vmem:[#allocation9 + $0x8] sm:$0xf]
    %v749 = vld [vmem:[#allocation9 + $0xc] sm:$0xf]
    %v750 = vld [vmem:[#allocation9 + $0x10] sm:$0xf]
    %v751 = vld [vmem:[#allocation9 + $0x14] sm:$0xf]
    %v752 = vld [vmem:[#allocation9 + $0x18] sm:$0xf]
    %v753 = vld [vmem:[#allocation9 + $0x1c] sm:$0xf]
    %v754 = vld [vmem:[#allocation9 + $0x20] sm:$0xf]
    %v755 = vld [vmem:[#allocation9 + $0x24] sm:$0xf]
    %v756 = vld [vmem:[#allocation9 + $0x28] sm:$0xf]
    %v757 = vld [vmem:[#allocation9 + $0x2c] sm:$0xf]
    %v758 = vld [vmem:[#allocation9 + $0x30] sm:$0xf]
    %v759 = vld [vmem:[#allocation9 + $0x34] sm:$0xf]
    %v760 = vld [vmem:[#allocation9 + $0x38] sm:$0xf]
    %v761 = vld [vmem:[#allocation9 + $0x3c] sm:$0xf]
    %v762 = vld [vmem:[%s5] sm:$0x1]
    %v764 = vlaneseq
    %v765 = vshrl.u32 %v764, 7
    %v766 = vsub.s32 0, %v765
    %v767 = vrot.slane %v762, %v766
    %v785 = vunpack.c.l.b16 %v746
    %v786 = vunpack.c.l.b16 %v747
    %v787 = vunpack.c.l.b16 %v748
    %v788 = vunpack.c.l.b16 %v749
    %v789 = vunpack.c.l.b16 %v750
    %v790 = vunpack.c.l.b16 %v751
    %v791 = vunpack.c.l.b16 %v752
    %v792 = vunpack.c.l.b16 %v753
    %v793 = vunpack.c.l.b16 %v754
    %v794 = vunpack.c.l.b16 %v755
    %v795 = vunpack.c.l.b16 %v756
    %v796 = vunpack.c.l.b16 %v757
    %v797 = vunpack.c.l.b16 %v758
    %v798 = vunpack.c.l.b16 %v759
    %v799 = vunpack.c.l.b16 %v760
    %v800 = vunpack.c.l.b16 %v761
    %v801 = vpack.c.b16 %v786, %v785
    %v802 = vpack.c.b16 %v788, %v787
    %v803 = vpack.c.b16 %v790, %v789
    %v804 = vpack.c.b16 %v792, %v791
    %v805 = vpack.c.b16 %v794, %v793
    %v806 = vpack.c.b16 %v796, %v795
    %v807 = vpack.c.b16 %v798, %v797
    %v808 = vpack.c.b16 %v800, %v799
    %817 = vmatprep.subr.bf16.mxu0 0
    %818 = vmatpush1.bf16.msra.mxu0 %v808
    %819 = vmatprep.subr.bf16.mxu0 0
    %820 = vmatpush1.bf16.msra.mxu0 %v807
    %821 = vmatprep.subr.bf16.mxu0 0
    %822 = vmatpush1.bf16.msra.mxu0 %v806
    %823 = vmatprep.subr.bf16.mxu0 0
    %824 = vmatpush1.bf16.msra.mxu0 %v805
    %825 = vmatprep.subr.bf16.mxu0 0
    %826 = vmatpush1.bf16.msra.mxu0 %v804
    %827 = vmatprep.subr.bf16.mxu0 0
    %828 = vmatpush1.bf16.msra.mxu0 %v803
    %829 = vmatprep.subr.bf16.mxu0 0
    %830 = vmatpush1.bf16.msra.mxu0 %v802
    %831 = vmatprep.subr.bf16.mxu0 0
    %832 = vmatpush1.bf16.msra.mxu0 %v801
    %833 = vmatprep.subr.bf16.mxu0 0
    %834 = vmatpush2.bf16.msra.mxu0 0
    %835 = vmatprep.subr.bf16.mxu0 0
    %836 = vmatpush2.bf16.msra.mxu0 0
    %837 = vmatprep.subr.bf16.mxu0 0
    %838 = vmatpush2.bf16.msra.mxu0 0
    %839 = vmatprep.subr.bf16.mxu0 0
    %840 = vmatpush2.bf16.msra.mxu0 0
    %841 = vmatprep.subr.bf16.mxu0 0
    %842 = vmatpush2.bf16.msra.mxu0 0
    %843 = vmatprep.subr.bf16.mxu0 0
    %844 = vmatpush2.bf16.msra.mxu0 0
    %845 = vmatprep.subr.bf16.mxu0 0
    %846 = vmatpush2.bf16.msra.mxu0 0
    %847 = vmatprep.subr.bf16.mxu0 0
    %848 = vmatpush2.bf16.msra.mxu0 0
    %849 = vmatprep.mubr.bf16.mxu0 0
    %850 = vmatmul.mubr.bf16.gmra.mxu0 %v738
    %v851 = vpop.f32.mrf.mxu0
    %v852 = vadd.f32 %v767, %v851
    %v853 = vpop.f32.mrf.mxu0
    %v854 = vpop.f32.mrf.mxu0
    %v855 = vadd.f32 %v767, %v854
    %v856 = vpop.f32.mrf.mxu0
    %857 = vmatprep.mubr.bf16.mxu0 0
    %858 = vmatmul.mubr.bf16.gmra.mxu0 %v739
    %v859 = vpop.f32.mrf.mxu0
    %v860 = vadd.f32 %v767, %v859
    %v861 = vpop.f32.mrf.mxu0
    %v862 = vpop.f32.mrf.mxu0
    %v863 = vadd.f32 %v767, %v862
    %v864 = vpop.f32.mrf.mxu0
    %865 = vmatprep.mubr.bf16.mxu0 0
    %866 = vmatmul.mubr.bf16.gmra.mxu0 %v740
    %v867 = vpop.f32.mrf.mxu0
    %v868 = vadd.f32 %v767, %v867
    %v869 = vpop.f32.mrf.mxu0
    %v870 = vpop.f32.mrf.mxu0
    %v871 = vadd.f32 %v767, %v870
    %v872 = vpop.f32.mrf.mxu0
    %873 = vmatprep.mubr.bf16.mxu0 0
    %874 = vmatmul.mubr.bf16.gmra.mxu0 %v741
    %v875 = vpop.f32.mrf.mxu0
    %v876 = vadd.f32 %v767, %v875
    %v877 = vpop.f32.mrf.mxu0
    %v878 = vpop.f32.mrf.mxu0
    %v879 = vadd.f32 %v767, %v878
    %v880 = vpop.f32.mrf.mxu0
    %881 = vmatprep.mubr.bf16.mxu0 0
    %882 = vmatmul.mubr.bf16.gmra.mxu0 %v742
    %v883 = vpop.f32.mrf.mxu0
    %v884 = vadd.f32 %v767, %v883
    %v885 = vpop.f32.mrf.mxu0
    %v886 = vpop.f32.mrf.mxu0
    %v887 = vadd.f32 %v767, %v886
    %v888 = vpop.f32.mrf.mxu0
    %889 = vmatprep.mubr.bf16.mxu0 0
    %890 = vmatmul.mubr.bf16.gmra.mxu0 %v743
    %v891 = vpop.f32.mrf.mxu0
    %v892 = vadd.f32 %v767, %v891
    %v893 = vpop.f32.mrf.mxu0
    %v894 = vpop.f32.mrf.mxu0
    %v895 = vadd.f32 %v767, %v894
    %v896 = vpop.f32.mrf.mxu0
    %897 = vmatprep.mubr.bf16.mxu0 0
    %898 = vmatmul.mubr.bf16.gmra.mxu0 %v744
    %v899 = vpop.f32.mrf.mxu0
    %v900 = vadd.f32 %v767, %v899
    %v901 = vpop.f32.mrf.mxu0
    %v902 = vpop.f32.mrf.mxu0
    %v903 = vadd.f32 %v767, %v902
    %v904 = vpop.f32.mrf.mxu0
    %905 = vmatprep.mubr.bf16.mxu0 0
    %906 = vmatmul.mubr.bf16.gmra.mxu0 %v745
    %v907 = vpop.f32.mrf.mxu0
    %v908 = vadd.f32 %v767, %v907
    %v909 = vpop.f32.mrf.mxu0
    %v910 = vpop.f32.mrf.mxu0
    %v911 = vadd.f32 %v767, %v910
    %v912 = vpop.f32.mrf.mxu0
    %913 = vdwg.mxu0
    %914 = vst [vmem:[#allocation11] sm:$0xff] %v852
    %915 = vst [vmem:[#allocation11 + $0x8] sm:$0xff] %v855
    %916 = vst [vmem:[#allocation11 + $0x10] sm:$0xff] %v860
    %917 = vst [vmem:[#allocation11 + $0x18] sm:$0xff] %v863
    %918 = vst [vmem:[#allocation11 + $0x20] sm:$0xff] %v868
    %919 = vst [vmem:[#allocation11 + $0x28] sm:$0xff] %v871
    %920 = vst [vmem:[#allocation11 + $0x30] sm:$0xff] %v876
    %921 = vst [vmem:[#allocation11 + $0x38] sm:$0xff] %v879
    %922 = vst [vmem:[#allocation11 + $0x40] sm:$0xff] %v884
    %923 = vst [vmem:[#allocation11 + $0x48] sm:$0xff] %v887
    %924 = vst [vmem:[#allocation11 + $0x50] sm:$0xff] %v892
    %925 = vst [vmem:[#allocation11 + $0x58] sm:$0xff] %v895
    %926 = vst [vmem:[#allocation11 + $0x60] sm:$0xff] %v900
    %927 = vst [vmem:[#allocation11 + $0x68] sm:$0xff] %v903
    %928 = vst [vmem:[#allocation11 + $0x70] sm:$0xff] %v908
    %929 = vst [vmem:[#allocation11 + $0x78] sm:$0xff] %v911
    // Predicated region
    $region42: #{tpu_custom_call.1} parent=1 // pred_check
      _
    $region43: #{tpu_custom_call.1} parent=1 // pred_check_branch
      %931 = sbr.rel (0) target = $region45
    $region44: #{tpu_custom_call.1} parent=1 // pred_region
      %s933 = ssub.s32 2048, 2048
      %934 = vsyncadd [#allocation5], %s933
      %s935 = sshll.u32 [#allocation11], 4
      %s936 = int_to_ptr.vmem [resolvable:$true] %s935
      %941 = dma.vmem_to_hbm [thread:$0]  %s936, 2048, %s6, [#allocation5], 128, 128, 8
    $region45: #{tpu_custom_call.1} parent=1 // pred_fallthru
      _
    // Predicated region
    $region46: #{tpu_custom_call.1} parent=1 // pred_check
      _
    $region47: #{tpu_custom_call.1} parent=1 // pred_check_branch
      %943 = sbr.rel (0) target = $region49
    $region48: #{tpu_custom_call.1} parent=1 // pred_region
      %944 = dma.done [#allocation5], 2048
    $region49: #{tpu_custom_call.1} parent=1 // pred_fallthru
      _
    %945 = vsyncpa [#allocation4], 1
    %946 = vsyncpa [#allocation7], 1
    %947 = vsyncpa [#allocation10], 1
    %948 = vsyncpa [#allocation5], 1

</llo_original>
